<compile_context>
chip_gen: v5e
topology: v5e:2x2
jax: 0.10.0
libtpu: 0.0.40
codegen_flags: <defaults>
</compile_context>

<pallas_src>
import jax
import jax.numpy as jnp
from jax.experimental import pallas as pl
from jax.experimental.pallas import tpu as pltpu

# Synthetic config values (config.channels_two / config.channels_one in the
# original code are external; chosen deterministically here).
STATE_SIZE = 47
ACTION_SIZE = 11
HIDDEN_SIZE = 64      # config.channels_two
HIDDEN_SIZE_2 = 32    # config.channels_one

MAX_TILE_B = 2048          # per-step batch tile cap (VMEM stays ~1 MiB/step)
SPLIT_THRESHOLD_B = 2048   # force >= 2 (even #) grid steps beyond this (v7x megacore)
TILE_ALIGN = 16            # sublane-safe for both f32 and bf16 blocks


def _round_up(n, m):
    return ((n + m - 1) // m) * m


def dqn_kernel(x_ref, w1_ref, b1_ref, w3_ref, b3_ref, wo_ref, bo_ref, o_ref):
    # Cast f32 activations to bf16 in-kernel (VPU has slack); MXU accumulates
    # in f32 via preferred_element_type; bias add / ReLU stay f32.
    x = x_ref[...].astype(jnp.bfloat16)
    h1 = jnp.dot(x, w1_ref[...], preferred_element_type=jnp.float32)
    h1 = jnp.maximum(h1 + b1_ref[...], 0.0)
    h2 = jnp.dot(h1.astype(jnp.bfloat16), w3_ref[...],
                 preferred_element_type=jnp.float32)
    h2 = jnp.maximum(h2 + b3_ref[...], 0.0)
    out = jnp.dot(h2.astype(jnp.bfloat16), wo_ref[...],
                  preferred_element_type=jnp.float32)
    o_ref[...] = out + bo_ref[...]


def _choose_tiling(B):
    """Pick (tile_b, n_steps) minimizing batch padding, tile <= MAX_TILE_B."""
    B = max(int(B), 1)
    n_steps = pl.cdiv(B, MAX_TILE_B)
    if B >= SPLIT_THRESHOLD_B:
        # v7x has 2 TensorCores: keep >= 2 and an even number of grid steps so
        # the "parallel" batch axis splits evenly.  No-op on v5e/v6e.
        n_steps = max(n_steps, 2)
        if n_steps % 2:
            n_steps += 1
    tile_b = _round_up(pl.cdiv(B, n_steps), TILE_ALIGN)
    return tile_b, n_steps


def dqn_forward(x, params):
    """x: (B, STATE_SIZE) float32 -> (B, ACTION_SIZE) float32."""
    w1, b1, w3, b3, wo, bo = params
    B = x.shape[0]
    tile_b, n_steps = _choose_tiling(B)
    b_pad = tile_b * n_steps

    if b_pad != B:
        # Only pad the batch dim (zero rows -> bias-only outputs, sliced off).
        x = jnp.pad(x, ((0, b_pad - B), (0, 0)))

    flops = 2 * b_pad * (STATE_SIZE * HIDDEN_SIZE
                         + HIDDEN_SIZE * HIDDEN_SIZE_2
                         + HIDDEN_SIZE_2 * ACTION_SIZE)
    bytes_accessed = (b_pad * STATE_SIZE * 4                 # f32 x in
                      + b_pad * ACTION_SIZE * 4              # f32 out
                      + (w1.size + w3.size + wo.size) * 2    # bf16 weights (once)
                      + (b1.size + b3.size + bo.size) * 4)   # f32 biases (once)

    const = lambda i: (0, 0)   # weights/biases: single block, VMEM-resident
    out = pl.pallas_call(
        dqn_kernel,
        out_shape=jax.ShapeDtypeStruct((b_pad, ACTION_SIZE), jnp.float32),
        grid=(n_steps,),
        in_specs=[
            pl.BlockSpec((tile_b, STATE_SIZE), lambda i: (i, 0)),       # x (f32)
            pl.BlockSpec((STATE_SIZE, HIDDEN_SIZE), const),             # w1 (bf16)
            pl.BlockSpec((1, HIDDEN_SIZE), const),                      # b1 (f32)
            pl.BlockSpec((HIDDEN_SIZE, HIDDEN_SIZE_2), const),          # w3 (bf16)
            pl.BlockSpec((1, HIDDEN_SIZE_2), const),                    # b3 (f32)
            pl.BlockSpec((HIDDEN_SIZE_2, ACTION_SIZE), const),          # wo (bf16)
            pl.BlockSpec((1, ACTION_SIZE), const),                      # bo (f32)
        ],
        out_specs=pl.BlockSpec((tile_b, ACTION_SIZE), lambda i: (i, 0)),
        compiler_params=pltpu.CompilerParams(
            dimension_semantics=("parallel",)),
        cost_estimate=pl.CostEstimate(
            flops=flops, bytes_accessed=bytes_accessed, transcendentals=0),
    )(x, w1, b1, w3, b3, wo, bo)

    return out[:B] if b_pad != B else out


def init_params(key):
    """Deterministic init mimicking PyTorch's U(-1/sqrt(fan_in), 1/sqrt(fan_in)).

    Weights are stored UNPADDED (47x64, 64x32, 32x11) in bf16 (matmul operand
    dtype); biases stay f32 (elementwise path).
    """
    def linear(key, fan_in, fan_out):
        kw, kb = jax.random.split(key)
        bound = 1.0 / jnp.sqrt(float(fan_in))
        w = jax.random.uniform(kw, (fan_in, fan_out), jnp.float32, -bound, bound)
        b = jax.random.uniform(kb, (1, fan_out), jnp.float32, -bound, bound)
        return w.astype(jnp.bfloat16), b

    k1, k2, k3 = jax.random.split(key, 3)
    w1, b1 = linear(k1, STATE_SIZE, HIDDEN_SIZE)
    w3, b3 = linear(k2, HIDDEN_SIZE, HIDDEN_SIZE_2)
    wo, bo = linear(k3, HIDDEN_SIZE_2, ACTION_SIZE)
    return (w1, b1, w3, b3, wo, bo)


def dqn_reference(x, params):
    """Pure-JAX reference applying the same bf16 rounding, f32 accumulation.

    Note: activations/weights are rounded to bf16 like the kernel, so this
    deviates from a true f32 PyTorch DQN at ~1e-2 relative level.
    """
    w1, b1, w3, b3, wo, bo = params
    xb = x.astype(jnp.bfloat16).astype(jnp.float32)
    h1 = jnp.maximum(xb @ w1.astype(jnp.float32) + b1, 0.0)
    h2 = jnp.maximum(h1.astype(jnp.bfloat16).astype(jnp.float32)
                     @ w3.astype(jnp.float32) + b3, 0.0)
    return (h2.astype(jnp.bfloat16).astype(jnp.float32)
            @ wo.astype(jnp.float32) + bo)


if __name__ == "__main__":
    key = jax.random.PRNGKey(0)
    k_params, k_x1, k_x2 = jax.random.split(key, 3)
    params = init_params(k_params)

    # Small shapes consistent with the module (state_size=47, action_size=11).
    for B, kx in ((4, k_x1), (37, k_x2)):   # 37 exercises batch padding
        x = jax.random.normal(kx, (B, STATE_SIZE), jnp.float32)
        out = jax.block_until_ready(dqn_forward(x, params))
        ref = dqn_reference(x, params)
        assert out.shape == (B, ACTION_SIZE), out.shape
        assert jnp.allclose(out, ref, atol=1e-3, rtol=1e-3), "mismatch vs reference"

    print("KERNEL_OK")
</pallas_src>

<mosaic_0001>
module attributes {stable_mosaic.version = 11 : i64} {
  func.func @dqn_kernel(%arg0: i32, %arg1: memref<16x47xf32, #tpu.memory_space<vmem>>, %arg2: memref<47x64xbf16, #tpu.memory_space<vmem>>, %arg3: memref<1x64xf32, #tpu.memory_space<vmem>>, %arg4: memref<64x32xbf16, #tpu.memory_space<vmem>>, %arg5: memref<1x32xf32, #tpu.memory_space<vmem>>, %arg6: memref<32x11xbf16, #tpu.memory_space<vmem>>, %arg7: memref<1x11xf32, #tpu.memory_space<vmem>>, %arg8: memref<16x11xf32, #tpu.memory_space<vmem>>) attributes {dimension_semantics = [#tpu.dimension_semantics<parallel>], iteration_bounds = array<i64: 1>, scalar_prefetch = 0 : i64, scratch_operands = 0 : i64, tpu.core_type = #tpu.core_type<tc>, window_params = [{transform_indices = @transform_0, window_bounds = array<i64: 16, 47>}, {pipeline_mode = #tpu.pipeline_mode<synchronous>, transform_indices = @transform_1, window_bounds = array<i64: 47, 64>}, {pipeline_mode = #tpu.pipeline_mode<synchronous>, transform_indices = @transform_2, window_bounds = array<i64: 1, 64>}, {pipeline_mode = #tpu.pipeline_mode<synchronous>, transform_indices = @transform_3, window_bounds = array<i64: 64, 32>}, {pipeline_mode = #tpu.pipeline_mode<synchronous>, transform_indices = @transform_4, window_bounds = array<i64: 1, 32>}, {pipeline_mode = #tpu.pipeline_mode<synchronous>, transform_indices = @transform_5, window_bounds = array<i64: 32, 11>}, {pipeline_mode = #tpu.pipeline_mode<synchronous>, transform_indices = @transform_6, window_bounds = array<i64: 1, 11>}, {transform_indices = @transform_7, window_bounds = array<i64: 16, 11>}]} {
    %c0 = arith.constant 0 : index
    %c0_0 = arith.constant 0 : index
    %0 = vector.load %arg1[%c0, %c0_0] : memref<16x47xf32, #tpu.memory_space<vmem>>, vector<16x47xf32>
    %1 = arith.truncf %0 : vector<16x47xf32> to vector<16x47xbf16>
    %c0_1 = arith.constant 0 : index
    %c0_2 = arith.constant 0 : index
    %2 = vector.load %arg2[%c0_1, %c0_2] : memref<47x64xbf16, #tpu.memory_space<vmem>>, vector<47x64xbf16>
    %cst = arith.constant dense<0.000000e+00> : vector<16x64xf32>
    %3 = tpu.matmul %1, %2, %cst {dimension_numbers = #tpu.dot_dimension_numbers<[1], [0], [0], [1], [0, 0, 1, 1], [], []>} : vector<16x47xbf16>, vector<47x64xbf16>, vector<16x64xf32> -> vector<16x64xf32>
    %c0_3 = arith.constant 0 : index
    %c0_4 = arith.constant 0 : index
    %4 = vector.load %arg3[%c0_3, %c0_4] : memref<1x64xf32, #tpu.memory_space<vmem>>, vector<1x64xf32>
    %5 = vector.broadcast %4 : vector<1x64xf32> to vector<16x64xf32>
    %6 = arith.addf %3, %5 : vector<16x64xf32>
    %cst_5 = arith.constant 0.000000e+00 : f32
    %7 = vector.broadcast %cst_5 : f32 to vector<16x64xf32>
    %8 = arith.maximumf %6, %7 : vector<16x64xf32>
    %9 = arith.truncf %8 : vector<16x64xf32> to vector<16x64xbf16>
    %c0_6 = arith.constant 0 : index
    %c0_7 = arith.constant 0 : index
    %10 = vector.load %arg4[%c0_6, %c0_7] : memref<64x32xbf16, #tpu.memory_space<vmem>>, vector<64x32xbf16>
    %cst_8 = arith.constant dense<0.000000e+00> : vector<16x32xf32>
    %11 = tpu.matmul %9, %10, %cst_8 {dimension_numbers = #tpu.dot_dimension_numbers<[1], [0], [0], [1], [0, 0, 1, 1], [], []>} : vector<16x64xbf16>, vector<64x32xbf16>, vector<16x32xf32> -> vector<16x32xf32>
    %c0_9 = arith.constant 0 : index
    %c0_10 = arith.constant 0 : index
    %12 = vector.load %arg5[%c0_9, %c0_10] : memref<1x32xf32, #tpu.memory_space<vmem>>, vector<1x32xf32>
    %13 = vector.broadcast %12 : vector<1x32xf32> to vector<16x32xf32>
    %14 = arith.addf %11, %13 : vector<16x32xf32>
    %cst_11 = arith.constant 0.000000e+00 : f32
    %15 = vector.broadcast %cst_11 : f32 to vector<16x32xf32>
    %16 = arith.maximumf %14, %15 : vector<16x32xf32>
    %17 = arith.truncf %16 : vector<16x32xf32> to vector<16x32xbf16>
    %c0_12 = arith.constant 0 : index
    %c0_13 = arith.constant 0 : index
    %18 = vector.load %arg6[%c0_12, %c0_13] : memref<32x11xbf16, #tpu.memory_space<vmem>>, vector<32x11xbf16>
    %cst_14 = arith.constant dense<0.000000e+00> : vector<16x11xf32>
    %19 = tpu.matmul %17, %18, %cst_14 {dimension_numbers = #tpu.dot_dimension_numbers<[1], [0], [0], [1], [0, 0, 1, 1], [], []>} : vector<16x32xbf16>, vector<32x11xbf16>, vector<16x11xf32> -> vector<16x11xf32>
    %c0_15 = arith.constant 0 : index
    %c0_16 = arith.constant 0 : index
    %20 = vector.load %arg7[%c0_15, %c0_16] : memref<1x11xf32, #tpu.memory_space<vmem>>, vector<1x11xf32>
    %21 = vector.broadcast %20 : vector<1x11xf32> to vector<16x11xf32>
    %22 = arith.addf %19, %21 : vector<16x11xf32>
    %c0_17 = arith.constant 0 : index
    %c0_18 = arith.constant 0 : index
    %23 = vector.load %arg8[%c0_17, %c0_18] : memref<16x11xf32, #tpu.memory_space<vmem>>, vector<16x11xf32>
    tpu.vector_store %arg8[%c0_17, %c0_18], %22 {strides = array<i32>} : memref<16x11xf32, #tpu.memory_space<vmem>>, vector<16x11xf32>,
    return
  }
  func.func @transform_0(%arg0: i32) -> (i32, i32) {
    %c0_i32 = arith.constant 0 : i32
    %c0_i32_0 = arith.constant 0 : i32
    return %arg0, %c0_i32 : i32, i32
  }
  func.func @transform_1(%arg0: i32) -> (i32, i32) {
    %c0_i32 = arith.constant 0 : i32
    %c0_i32_0 = arith.constant 0 : i32
    %c0_i32_1 = arith.constant 0 : i32
    return %c0_i32, %c0_i32_0 : i32, i32
  }
  func.func @transform_2(%arg0: i32) -> (i32, i32) {
    %c0_i32 = arith.constant 0 : i32
    %c0_i32_0 = arith.constant 0 : i32
    %c0_i32_1 = arith.constant 0 : i32
    return %c0_i32, %c0_i32_0 : i32, i32
  }
  func.func @transform_3(%arg0: i32) -> (i32, i32) {
    %c0_i32 = arith.constant 0 : i32
    %c0_i32_0 = arith.constant 0 : i32
    %c0_i32_1 = arith.constant 0 : i32
    return %c0_i32, %c0_i32_0 : i32, i32
  }
  func.func @transform_4(%arg0: i32) -> (i32, i32) {
    %c0_i32 = arith.constant 0 : i32
    %c0_i32_0 = arith.constant 0 : i32
    %c0_i32_1 = arith.constant 0 : i32
    return %c0_i32, %c0_i32_0 : i32, i32
  }
  func.func @transform_5(%arg0: i32) -> (i32, i32) {
    %c0_i32 = arith.constant 0 : i32
    %c0_i32_0 = arith.constant 0 : i32
    %c0_i32_1 = arith.constant 0 : i32
    return %c0_i32, %c0_i32_0 : i32, i32
  }
  func.func @transform_6(%arg0: i32) -> (i32, i32) {
    %c0_i32 = arith.constant 0 : i32
    %c0_i32_0 = arith.constant 0 : i32
    %c0_i32_1 = arith.constant 0 : i32
    return %c0_i32, %c0_i32_0 : i32, i32
  }
  func.func @transform_7(%arg0: i32) -> (i32, i32) {
    %c0_i32 = arith.constant 0 : i32
    %c0_i32_0 = arith.constant 0 : i32
    return %arg0, %c0_i32 : i32, i32
  }
}

</mosaic_0001>

<llo_original>
// kernel: tpu_custom_call.1
$region0: #{tpu_custom_call.1}
  #allocation0 [shape = 'u32[]', space=smem, size = 0x4, offset = 0x4, fixed_abs, tag = 'smem constant byte address 0x4 - core index']
  #allocation1 [shape = 'u32[72,128]{1,0:T(1,128)}', space=vmem, size = 0x9000, scoped, tag = 'internal scratch']
  %s0 = inlined_call_operand.vmem [shape: f32[16,47], index: 0, kind: input, shape index: {}]
  %s1 = inlined_call_operand.vmem [shape: bf16[47,64], index: 1, kind: input, shape index: {}]
  %s2 = inlined_call_operand.vmem [shape: f32[1,64], index: 2, kind: input, shape index: {}]
  %s3 = inlined_call_operand.vmem [shape: bf16[64,32], index: 3, kind: input, shape index: {}]
  %s4 = inlined_call_operand.vmem [shape: f32[1,32], index: 4, kind: input, shape index: {}]
  %s5 = inlined_call_operand.vmem [shape: bf16[32,11], index: 5, kind: input, shape index: {}]
  %s6 = inlined_call_operand.vmem [shape: f32[1,11], index: 6, kind: input, shape index: {}]
  %s7 = inlined_call_operand.hbm [shape: f32[16,11], index: 7, kind: output, shape index: {}]
  %s8 = sld [smem:[#allocation0]]
  $region38: #{tpu_custom_call.1} parent=0
    _
  %s10 = ssub.s32 1, %s8
  %s11 = scalar_select 0, %s10, %s8
  $region1: #{tpu_custom_call.1} parent=0
    #allocation2 [shape = 'u8[8192]{0}', space=vmem, size = 0x2000, scoped, tag = 'output window, operand 0, single buffered']
    #allocation3 [shape = 's32[1]{0}', space=sflag, size = 0x4, scoped, tag = 'scoped memory for tpu_custom_call.1']
    %12 = vsyncpa [#allocation3], 0
    // Predicated region
    $region2: #{tpu_custom_call.1} parent=1 // pred_check
      _
    $region3: #{tpu_custom_call.1} parent=1 // pred_check_branch
      %14 = sbr.rel (0) target = $region5
    $region4: #{tpu_custom_call.1} parent=1 // pred_region
      _
    $region5: #{tpu_custom_call.1} parent=1 // pred_fallthru
      _
    // Predicated region
    $region6: #{tpu_custom_call.1} parent=1 // pred_check
      _
    $region7: #{tpu_custom_call.1} parent=1 // pred_check_branch
      %16 = sbr.rel (0) target = $region9
    $region8: #{tpu_custom_call.1} parent=1 // pred_region
      _
    $region9: #{tpu_custom_call.1} parent=1 // pred_fallthru
      _
    // Predicated region
    $region10: #{tpu_custom_call.1} parent=1 // pred_check
      _
    $region11: #{tpu_custom_call.1} parent=1 // pred_check_branch
      %18 = sbr.rel (0) target = $region13
    $region12: #{tpu_custom_call.1} parent=1 // pred_region
      _
    $region13: #{tpu_custom_call.1} parent=1 // pred_fallthru
      _
    // Predicated region
    $region14: #{tpu_custom_call.1} parent=1 // pred_check
      _
    $region15: #{tpu_custom_call.1} parent=1 // pred_check_branch
      %20 = sbr.rel (0) target = $region17
    $region16: #{tpu_custom_call.1} parent=1 // pred_region
      _
    $region17: #{tpu_custom_call.1} parent=1 // pred_fallthru
      _
    // Predicated region
    $region18: #{tpu_custom_call.1} parent=1 // pred_check
      _
    $region19: #{tpu_custom_call.1} parent=1 // pred_check_branch
      %22 = sbr.rel (0) target = $region21
    $region20: #{tpu_custom_call.1} parent=1 // pred_region
      _
    $region21: #{tpu_custom_call.1} parent=1 // pred_fallthru
      _
    // Predicated region
    $region22: #{tpu_custom_call.1} parent=1 // pred_check
      _
    $region23: #{tpu_custom_call.1} parent=1 // pred_check_branch
      %24 = sbr.rel (0) target = $region25
    $region24: #{tpu_custom_call.1} parent=1 // pred_region
      _
    $region25: #{tpu_custom_call.1} parent=1 // pred_fallthru
      _
    // Predicated region
    $region26: #{tpu_custom_call.1} parent=1 // pred_check
      _
    $region27: #{tpu_custom_call.1} parent=1 // pred_check_branch
      %26 = sbr.rel (0) target = $region29
    $region28: #{tpu_custom_call.1} parent=1 // pred_region
      _
    $region29: #{tpu_custom_call.1} parent=1 // pred_fallthru
      _
    %v28 = vld [vmem:[%s0] sm:$0xff]
    %v29 = vld [vmem:[%s0 + $0x8] sm:$0xff]
    %v30 = vpack.c.bf16 %v29, %v28
    %v31 = vld [vmem:[%s1] sm:$0xf]
    %v32 = vld [vmem:[%s1 + $0x4] sm:$0xf]
    %v33 = vld [vmem:[%s1 + $0x8] sm:$0xf]
    %v34 = vld [vmem:[%s1 + $0xc] sm:$0xf]
    %v35 = vld [vmem:[%s1 + $0x10] sm:$0xf]
    %v36 = vld [vmem:[%s1 + $0x14] sm:$0xf]
    %v37 = vld [vmem:[%s2] sm:$0x1]
    %v39 = vperm.slane %v37, 0
    %v47 = vunpack.c.l.b16 %v31
    %v48 = vunpack.c.l.b16 %v32
    %v49 = vunpack.c.l.b16 %v33
    %v50 = vunpack.c.l.b16 %v34
    %v51 = vunpack.c.l.b16 %v35
    %v52 = vunpack.c.l.b16 %v36
    %v53 = vpack.c.b16 %v48, %v47
    %v54 = vpack.c.b16 %v50, %v49
    %v55 = vpack.c.b16 %v52, %v51
    %vm58 = vcmask 384000
    %v60 = vsel %vm58, %v30, 0
    %vm62 = vcmask 1046528
    %vm63 = vcmask 1047552
    %v64 = vsel %vm62, 4294967295, 65535
    %v65 = vsel %vm63, %v64, 0
    %v67 = vand.u32 %v55, %v65
    %69 = vmatpush.bf16.msra.mxu0 0
    %70 = vmatpush.bf16.msra.mxu0 0
    %71 = vmatpush.bf16.msra.mxu0 0
    %72 = vmatpush.bf16.msra.mxu0 0
    %73 = vmatpush.bf16.msra.mxu0 0
    %74 = vmatpush.bf16.msra.mxu0 %v67
    %75 = vmatpush.bf16.msra.mxu0 %v54
    %76 = vmatpush.bf16.msra.mxu0 %v53
    %77 = vmatmul.bf16.gmra.mxu0 %v60
    %v78 = vpop.f32.mrf.mxu0
    %v79 = vadd.f32 %v39, %v78
    %v80 = vpop.f32.mrf.mxu0
    %v81 = vadd.f32 %v39, %v80
    %82 = vdwg.mxu0
    %v83 = vmax.f32 %v79, 0.0
    %v84 = vmax.f32 %v81, 0.0
    %v85 = vpack.c.bf16 %v84, %v83
    %v86 = vld [vmem:[%s3] sm:$0xf]
    %v87 = vld [vmem:[%s3 + $0x4] sm:$0xf]
    %v88 = vld [vmem:[%s3 + $0x8] sm:$0xf]
    %v89 = vld [vmem:[%s3 + $0xc] sm:$0xf]
    %v90 = vld [vmem:[%s3 + $0x10] sm:$0xf]
    %v91 = vld [vmem:[%s3 + $0x14] sm:$0xf]
    %v92 = vld [vmem:[%s3 + $0x18] sm:$0xf]
    %v93 = vld [vmem:[%s3 + $0x1c] sm:$0xf]
    %v94 = vld [vmem:[%s4] sm:$0x1]
    %v96 = vperm.slane %v94, 0
    %v106 = vunpack.c.l.b16 %v86
    %v107 = vunpack.c.l.b16 %v87
    %v108 = vunpack.c.l.b16 %v88
    %v109 = vunpack.c.l.b16 %v89
    %v110 = vunpack.c.l.b16 %v90
    %v111 = vunpack.c.l.b16 %v91
    %v112 = vunpack.c.l.b16 %v92
    %v113 = vunpack.c.l.b16 %v93
    %v114 = vpack.c.b16 %v107, %v106
    %v115 = vpack.c.b16 %v109, %v108
    %v116 = vpack.c.b16 %v111, %v110
    %v117 = vpack.c.b16 %v113, %v112
    %vm122 = vcmask 523264
    %v124 = vsel %vm122, %v85, 0
    %126 = vmatpush.bf16.msra.mxu0 0
    %127 = vmatpush.bf16.msra.mxu0 0
    %128 = vmatpush.bf16.msra.mxu0 0
    %129 = vmatpush.bf16.msra.mxu0 0
    %130 = vmatpush.bf16.msra.mxu0 %v117
    %131 = vmatpush.bf16.msra.mxu0 %v116
    %132 = vmatpush.bf16.msra.mxu0 %v115
    %133 = vmatpush.bf16.msra.mxu0 %v114
    %134 = vmatmul.bf16.gmra.mxu0 %v124
    %v135 = vpop.f32.mrf.mxu0
    %v136 = vadd.f32 %v96, %v135
    %v137 = vpop.f32.mrf.mxu0
    %v138 = vadd.f32 %v96, %v137
    %139 = vdwg.mxu0
    %v140 = vmax.f32 %v136, 0.0
    %v141 = vmax.f32 %v138, 0.0
    %v142 = vpack.c.bf16 %v141, %v140
    %v143 = vld [vmem:[%s5] sm:$0xf]
    %v144 = vld [vmem:[%s5 + $0x4] sm:$0xf]
    %v145 = vld [vmem:[%s5 + $0x8] sm:$0xf]
    %v146 = vld [vmem:[%s5 + $0xc] sm:$0xf]
    %v147 = vld [vmem:[%s6] sm:$0x1]
    %v149 = vperm.slane %v147, 0
    %v155 = vunpack.c.l.b16 %v143
    %v156 = vunpack.c.l.b16 %v144
    %v157 = vunpack.c.l.b16 %v145
    %v158 = vunpack.c.l.b16 %v146
    %v159 = vpack.c.b16 %v156, %v155
    %v160 = vpack.c.b16 %v158, %v157
    %vm163 = vcmask 261120
    %v165 = vsel %vm163, %v142, 0
    %167 = vmatpush.bf16.msra.mxu0 0
    %168 = vmatpush.bf16.msra.mxu0 0
    %169 = vmatpush.bf16.msra.mxu0 0
    %170 = vmatpush.bf16.msra.mxu0 0
    %171 = vmatpush.bf16.msra.mxu0 0
    %172 = vmatpush.bf16.msra.mxu0 0
    %173 = vmatpush.bf16.msra.mxu0 %v160
    %174 = vmatpush.bf16.msra.mxu0 %v159
    %175 = vmatmul.bf16.gmra.mxu0 %v165
    %v176 = vpop.f32.mrf.mxu0
    %v177 = vadd.f32 %v149, %v176
    %v178 = vpop.f32.mrf.mxu0
    %v179 = vadd.f32 %v149, %v178
    %180 = vdwg.mxu0
    %vm181 = vcmask 89088
    %182 = vst.msk [vmem:[#allocation2] sm:$0xff] %vm181, %v177
    %183 = vst.msk [vmem:[#allocation2 + $0x8] sm:$0xff] %vm181, %v179
    // Predicated region
    $region30: #{tpu_custom_call.1} parent=1 // pred_check
      _
    $region31: #{tpu_custom_call.1} parent=1 // pred_check_branch
      %185 = sbr.rel (0) target = $region33
    $region32: #{tpu_custom_call.1} parent=1 // pred_region
      %187 = vsyncadd [#allocation3], 0
      %s188 = sshll.u32 [#allocation2], 4
      %s189 = int_to_ptr.vmem [resolvable:$true] %s188
      %s190 = sshll.u32 %s7, 4
      %s191 = int_to_ptr.hbm [resolvable:$true] %s190
      %196 = dma.vmem_to_hbm [thread:$0]  %s189, 256, %s191, [#allocation3], 128, 128, 8
    $region33: #{tpu_custom_call.1} parent=1 // pred_fallthru
      _
    // Predicated region
    $region34: #{tpu_custom_call.1} parent=1 // pred_check
      _
    $region35: #{tpu_custom_call.1} parent=1 // pred_check_branch
      %198 = sbr.rel (0) target = $region37
    $region36: #{tpu_custom_call.1} parent=1 // pred_region
      %200 = dma.done [#allocation3], 256
    $region37: #{tpu_custom_call.1} parent=1 // pred_fallthru
      _
    %201 = vsyncpa [#allocation3], 1

</llo_original>
